<compile_context>
chip_gen: v6e
topology: v6e:2x2x1
jax: 0.10.0
libtpu: 0.0.40
codegen_flags: <defaults>
</compile_context>

<pallas_src>
import functools

import jax
import jax.numpy as jnp
from jax import lax
from jax.experimental import pallas as pl
from jax.experimental.pallas import tpu as pltpu

EPS = 1e-5


# ----------------------------------------------------------------------------
# helpers
# ----------------------------------------------------------------------------
def _pick_row_tile(total, target):
    """Largest multiple-of-8 divisor of `total` that is <= target (or full)."""
    if total <= target:
        return total
    best = None
    for t in range(8, target + 1, 8):
        if total % t == 0:
            best = t
    if best is None:
        # TODO(synk): ragged last-tile support; fall back to a single full tile.
        best = total
    return best


def _const_spec(block_shape, index_map):
    """BlockSpec for a never-changing block: request single buffering so the
    resident weights are not double-buffered.  Degrades gracefully if this
    Pallas version does not expose pipeline_mode."""
    try:
        return pl.BlockSpec(block_shape, index_map, pipeline_mode=pl.Buffered(1))
    except Exception:  # API drift: fall back to the default (double-buffered)
        return pl.BlockSpec(block_shape, index_map)


# ----------------------------------------------------------------------------
# Kernel A: pooled branch -> per-batch projected row.
# global avg pool + 1x1 conv + BN + ReLU, then multiplied by the pooling slice
# of the projection weight.  Row-tiled reduction over H*W.
# ----------------------------------------------------------------------------
def _pool_kernel(x_ref, wp_ref, sp_ref, bp_ref, wpp_ref, o_ref, sum_ref, *, HW):
    r = pl.program_id(1)

    @pl.when(r == 0)
    def _():
        sum_ref[...] = jnp.zeros_like(sum_ref)

    sum_ref[...] += jnp.sum(x_ref[0].astype(jnp.float32), axis=0, keepdims=True)

    @pl.when(r == pl.num_programs(1) - 1)
    def _():
        mean = sum_ref[...] * (1.0 / HW)                                 # (1, Cin)
        y = jnp.dot(mean, wp_ref[...], preferred_element_type=jnp.float32)
        y = jnp.maximum(y * sp_ref[...] + bp_ref[...], 0.0)             # (1, Cout)
        # bilinear upsample of a 1x1 map == constant broadcast, so its whole
        # contribution to the projection is this single row:
        o_ref[0] = jnp.dot(y, wpp_ref[...].astype(jnp.float32),
                           preferred_element_type=jnp.float32)


def _pool_project_rows(x3, wp, sp, bp, wp_pool, *, rows_target=1024):
    N, HW, Cin = x3.shape
    Cout = wp.shape[-1]
    out_ch = wp_pool.shape[-1]
    tmp = _pick_row_tile(HW, rows_target)
    Rp = HW // tmp
    kernel = functools.partial(_pool_kernel, HW=HW)
    return pl.pallas_call(
        kernel,
        out_shape=jax.ShapeDtypeStruct((N, 1, out_ch), jnp.float32),
        grid=(N, Rp),
        in_specs=[
            pl.BlockSpec((1, tmp, Cin), lambda n, r: (n, r, 0)),
            _const_spec((Cin, Cout), lambda n, r: (0, 0)),
            _const_spec((1, Cout), lambda n, r: (0, 0)),
            _const_spec((1, Cout), lambda n, r: (0, 0)),
            _const_spec((Cout, out_ch), lambda n, r: (0, 0)),
        ],
        out_specs=pl.BlockSpec((1, 1, out_ch), lambda n, r: (n, 0, 0)),
        scratch_shapes=[pltpu.VMEM((1, Cin), jnp.float32)],
        compiler_params=pltpu.CompilerParams(
            dimension_semantics=("parallel", "arbitrary")),
    )(x3, wp, sp.reshape(1, Cout), bp.reshape(1, Cout), wp_pool)


# ----------------------------------------------------------------------------
# Kernel B: fully fused ASPP branches + concat + projection.
# One (batch, row_split, row_tile) grid step:
#   - wait on the manually double-buffered DMA of the halo'd bf16 input slab,
#   - branch 0 (1x1 conv+BN+ReLU) and every dilated branch (9 row-offset taps,
#     W boundary masked) are computed from the same slab,
#   - each branch is immediately multiplied by its slice of the projection
#     weight and accumulated into a VMEM scratch, the pooled row is added as a
#     bias, then the projection BN + ReLU writes the final tile.
# ----------------------------------------------------------------------------
def _aspp_fused_kernel(xh_ref, w0_ref, s0_ref, b0_ref, wr_ref, sr_ref, br_ref,
                       wp0_ref, wpr_ref, pool_ref, sp_ref, bp_ref,
                       o_ref, buf, sem, acc_ref, yb_ref,
                       *, rates, W, P, tm, HpW):
    d_max = max(rates)
    n = pl.program_id(0)
    ro = pl.program_id(1)
    ri = pl.program_id(2)
    R_inner = pl.num_programs(2)
    buf_rows = buf.shape[1]
    center = d_max * (W + 1)          # offset of the tile's own rows in the slab
    slot = ri % 2

    def start_fetch(ri_next, s):
        # first flattened (H-padded) row needed by tile ri_next, incl. halo
        q_next = (ro * R_inner + ri_next) * tm
        start = n * HpW + q_next + (P - d_max) * W - d_max
        pltpu.make_async_copy(xh_ref.at[pl.ds(start, buf_rows)],
                              buf.at[s], sem.at[s]).start()

    # Warm-up once per (n, ro) chunk so the DMA chain stays valid when either
    # 'parallel' grid axis is sharded across TensorCores (v7x megacore).
    @pl.when(ri == 0)
    def _():
        start_fetch(0, 0)

    @pl.when(ri + 1 < R_inner)
    def _():
        start_fetch(ri + 1, 1 - slot)

    pltpu.make_async_copy(xh_ref.at[pl.ds(0, buf_rows)],
                          buf.at[slot], sem.at[slot]).wait()

    q = (ro * R_inner + ri) * tm
    # output w coordinate of every flattened position in this tile
    col = (q + lax.broadcasted_iota(jnp.int32, (tm, 1), 0)) % W

    x_tile = buf[slot, pl.ds(center, tm), :]                          # (tm, Cin) bf16

    # branch 0: 1x1 conv + BN + ReLU, projected on the fly; pooled branch folds
    # in as a per-batch constant row.
    br0 = jnp.maximum(
        jnp.dot(x_tile, w0_ref[...], preferred_element_type=jnp.float32)
        * s0_ref[...] + b0_ref[...], 0.0)
    acc_ref[...] = (jnp.dot(br0, wp0_ref[...].astype(jnp.float32),
                            preferred_element_type=jnp.float32)
                    + pool_ref[0])

    # atrous branches: each 3x3 tap is a contiguous row-offset slice of the
    # H-padded slab.  Taps are grouped by kw so (a) the three unmasked centre
    # taps accumulate consecutively (MRB-friendly on v7x) and (b) each
    # W-boundary mask is built and applied once per rate instead of per tap.
    for j, d in enumerate(rates):
        def tap(kh, kw, _d=d):
            off = center + (kh - 1) * _d * W + (kw - 1) * _d
            return buf[slot, pl.ds(off, tm), :]

        def col_sum(kw, _j=j, _tap=tap):
            s = jnp.dot(_tap(0, kw), wr_ref[_j, kw],
                        preferred_element_type=jnp.float32)
            s = s + jnp.dot(_tap(1, kw), wr_ref[_j, 3 + kw],
                            preferred_element_type=jnp.float32)
            s = s + jnp.dot(_tap(2, kw), wr_ref[_j, 6 + kw],
                            preferred_element_type=jnp.float32)
            return s

        yb_ref[...] = col_sum(1)                                      # centre taps
        yb_ref[...] += jnp.where(col >= d, col_sum(0), 0.0)           # left W-pad
        yb_ref[...] += jnp.where(col < W - d, col_sum(2), 0.0)        # right W-pad
        yb = jnp.maximum(yb_ref[...] * sr_ref[j] + br_ref[j], 0.0)
        acc_ref[...] += jnp.dot(yb, wpr_ref[j].astype(jnp.float32),
                                preferred_element_type=jnp.float32)

    # projection BN + ReLU (Dropout(0.5) is identity in eval mode)
    o_ref[0] = jnp.maximum(acc_ref[...] * sp_ref[...] + bp_ref[...], 0.0)


def _fused_aspp_project(xh_flat, w0, s0, b0, wr, sr, br, wp0, wpr, pool_rows,
                        sproj, bproj, *, rates, N, H, W, P, tm, HpW):
    nr = len(rates)
    d_max = max(rates)
    Cin = xh_flat.shape[-1]
    Cout = w0.shape[-1]
    out_ch = wp0.shape[-1]
    HW = H * W
    R = HW // tm
    assert R * tm == HW
    # split the row axis so v7x's second TensorCore has work even at N == 1;
    # harmless (one extra warm-up DMA per chunk) on single-core chips.
    row_splits = 2 if R % 2 == 0 else 1
    R_inner = R // row_splits
    buf_rows = tm + 2 * d_max * (W + 1)

    kernel = functools.partial(_aspp_fused_kernel, rates=tuple(rates), W=W, P=P,
                               tm=tm, HpW=HpW)

    flops = 2 * N * HW * (Cin * Cout * (1 + 9 * nr) + (nr + 1) * Cout * out_ch)
    bytes_accessed = int(
        2 * (N * R * buf_rows * Cin + int(wr.size) + int(w0.size)
             + int(wp0.size) + int(wpr.size))                         # bf16 reads
        + 4 * (N * HW * out_ch + int(sr.size) + int(br.size)
               + int(pool_rows.size) + int(s0.size) + int(b0.size)
               + int(sproj.size) + int(bproj.size)))

    # Explicit VMEM budget: single-buffered bf16 weights + double-buffered
    # bf16 slab + double-buffered f32 output tile + f32 accumulator scratch.
    vmem_needed = (
        2 * (int(w0.size) + int(wr.size) + int(wp0.size) + int(wpr.size))
        + 4 * (int(s0.size) + int(b0.size) + int(sr.size) + int(br.size)
               + int(sproj.size) + int(bproj.size))
        + 2 * 2 * buf_rows * Cin
        + 2 * 4 * tm * out_ch
        + 4 * tm * (out_ch + Cout)
        + 2 * 4 * out_ch)
    vmem_limit = int(min(max(32 << 20, int(vmem_needed * 1.3) + (2 << 20)),
                         100 << 20))

    return pl.pallas_call(
        kernel,
        out_shape=jax.ShapeDtypeStruct((N, HW, out_ch), jnp.float32),
        grid=(N, row_splits, R_inner),
        in_specs=[
            pl.BlockSpec(memory_space=pl.ANY),                               # xh_flat (manual DMA)
            _const_spec((Cin, Cout), lambda n, o, r: (0, 0)),                # w0 (bf16)
            _const_spec((1, Cout), lambda n, o, r: (0, 0)),                  # s0
            _const_spec((1, Cout), lambda n, o, r: (0, 0)),                  # b0
            _const_spec((nr, 9, Cin, Cout), lambda n, o, r: (0, 0, 0, 0)),   # wr (bf16)
            _const_spec((nr, 1, Cout), lambda n, o, r: (0, 0, 0)),           # sr
            _const_spec((nr, 1, Cout), lambda n, o, r: (0, 0, 0)),           # br
            _const_spec((Cout, out_ch), lambda n, o, r: (0, 0)),             # wproj: branch 0
            _const_spec((nr, Cout, out_ch), lambda n, o, r: (0, 0, 0)),      # wproj: rates
            pl.BlockSpec((1, 1, out_ch), lambda n, o, r: (n, 0, 0)),         # pooled rows
            _const_spec((1, out_ch), lambda n, o, r: (0, 0)),                # sproj
            _const_spec((1, out_ch), lambda n, o, r: (0, 0)),                # bproj
        ],
        out_specs=pl.BlockSpec((1, tm, out_ch),
                               lambda n, o, r: (n, o * R_inner + r, 0)),
        scratch_shapes=[
            pltpu.VMEM((2, buf_rows, Cin), jnp.bfloat16),   # double-buffered input slab
            pltpu.SemaphoreType.DMA((2,)),
            pltpu.VMEM((tm, out_ch), jnp.float32),          # projection accumulator
            pltpu.VMEM((tm, Cout), jnp.float32),            # per-branch pre-BN accum
        ],
        compiler_params=pltpu.CompilerParams(
            dimension_semantics=("parallel", "parallel", "arbitrary"),
            vmem_limit_bytes=vmem_limit),
        cost_estimate=pl.CostEstimate(flops=flops, transcendentals=0,
                                      bytes_accessed=bytes_accessed),
    )(xh_flat, w0, s0, b0, wr, sr, br, wp0, wpr, pool_rows, sproj, bproj)


# ----------------------------------------------------------------------------
# Parameter init (deterministic, synthetic) and ASPP forward.
# ----------------------------------------------------------------------------
def _bn_params(key, c):
    k1, k2, k3, k4 = jax.random.split(key, 4)
    gamma = jax.random.uniform(k1, (c,), jnp.float32, 0.5, 1.5)
    beta = jax.random.normal(k2, (c,), jnp.float32) * 0.1
    mean = jax.random.normal(k3, (c,), jnp.float32) * 0.1
    var = jax.random.uniform(k4, (c,), jnp.float32, 0.5, 1.5)
    scale = gamma / jnp.sqrt(var + EPS)
    bias = beta - mean * scale
    return scale, bias


def init_params(key, in_ch, rates, out_ch):
    keys = iter(jax.random.split(key, 64))

    def nrm(shape, s=0.1):
        return jax.random.normal(next(keys), shape, jnp.float32) * s

    p = {}
    p["w0"] = nrm((in_ch, out_ch))                      # 1x1 conv (Cin, Cout)
    p["s0"], p["b0"] = _bn_params(next(keys), out_ch)
    for i, _ in enumerate(rates):
        p[f"w_r{i}"] = nrm((3, 3, in_ch, out_ch))       # 3x3 conv HWIO
        p[f"s_r{i}"], p[f"b_r{i}"] = _bn_params(next(keys), out_ch)
    p["wp"] = nrm((in_ch, out_ch))                      # pooling 1x1 conv
    p["sp"], p["bp"] = _bn_params(next(keys), out_ch)
    cat_ch = (len(rates) + 2) * out_ch
    p["wproj"] = nrm((cat_ch, out_ch))                  # projection 1x1 conv
    p["sproj"], p["bproj"] = _bn_params(next(keys), out_ch)
    return p


def aspp_forward(x_nchw, params, rates, *, conv_rows_target=512,
                 pool_rows_target=1024):
    x = jnp.transpose(x_nchw, (0, 2, 3, 1)).astype(jnp.float32)  # NCHW -> NHWC
    N, H, W, Cin = x.shape
    HW = H * W
    Cout = params["w0"].shape[1]
    out_ch = params["wproj"].shape[1]
    nr = len(rates)
    d_max = max(rates)
    assert d_max <= W, "padding/masking scheme requires max dilation <= W"
    P = d_max + 1

    # bf16 MXU inputs (f32 accumulation everywhere) halve weight/slab VMEM and
    # HBM bytes and unlock bf16 MXU throughput.
    xb = x.astype(jnp.bfloat16)

    # One shared zero-pad (H only; W boundary handled in-kernel by masking),
    # flattened so every conv tap is a contiguous row-offset slice.
    xh = jnp.pad(xb, ((0, 0), (P, P), (0, 0), (0, 0)))
    HpW = (H + 2 * P) * W
    xh_flat = xh.reshape(N * HpW, Cin)
    x3 = xb.reshape(N, HW, Cin)

    # Stack atrous weights / folded-BN params; split the projection weight
    # into per-branch slices (concat order: branch0, rates..., pooling).
    w0 = params["w0"].astype(jnp.bfloat16)
    wr = jnp.stack([params[f"w_r{i}"].reshape(9, Cin, Cout)
                    for i in range(nr)]).astype(jnp.bfloat16)
    sr = jnp.stack([params[f"s_r{i}"].reshape(1, Cout) for i in range(nr)])
    br = jnp.stack([params[f"b_r{i}"].reshape(1, Cout) for i in range(nr)])
    wproj = params["wproj"].astype(jnp.bfloat16)
    wp0 = wproj[:Cout]
    wpr = wproj[Cout:(1 + nr) * Cout].reshape(nr, Cout, out_ch)
    wp_pool = wproj[(1 + nr) * Cout:]

    # pooled branch -> per-batch projected (1, out_ch) row
    pool_rows = _pool_project_rows(x3, params["wp"], params["sp"], params["bp"],
                                   wp_pool, rows_target=pool_rows_target)

    # flattened-HW row tile (multiple of 8) for the fused kernel
    tm = _pick_row_tile(HW, conv_rows_target)

    out = _fused_aspp_project(
        xh_flat, w0,
        params["s0"].reshape(1, Cout), params["b0"].reshape(1, Cout),
        wr, sr, br, wp0, wpr, pool_rows,
        params["sproj"].reshape(1, out_ch), params["bproj"].reshape(1, out_ch),
        rates=tuple(rates), N=N, H=H, W=W, P=P, tm=tm, HpW=HpW)

    # nn.Dropout(0.5): identity in eval mode
    return jnp.transpose(out.reshape(N, H, W, out_ch), (0, 3, 1, 2))  # NHWC -> NCHW


# ----------------------------------------------------------------------------
# Pure-JAX reference (same bf16 weight/input quantization, f32 accumulation).
# ----------------------------------------------------------------------------
def aspp_reference(x_nchw, params, rates):
    x = jnp.transpose(x_nchw, (0, 2, 3, 1)).astype(jnp.float32)
    xb = x.astype(jnp.bfloat16)
    N, H, W, _ = x.shape
    dn = ("NHWC", "HWIO", "NHWC")
    f32 = jnp.float32

    def bnrelu(z, s, b):
        return jnp.maximum(z * s + b, 0.0)

    outs = []
    w0 = params["w0"].astype(jnp.bfloat16).reshape(1, 1, *params["w0"].shape)
    z = lax.conv_general_dilated(xb, w0, (1, 1), "VALID", dimension_numbers=dn,
                                 preferred_element_type=f32)
    outs.append(bnrelu(z, params["s0"], params["b0"]))
    for i, d in enumerate(rates):
        z = lax.conv_general_dilated(
            xb, params[f"w_r{i}"].astype(jnp.bfloat16), (1, 1),
            [(d, d), (d, d)], rhs_dilation=(d, d), dimension_numbers=dn,
            preferred_element_type=f32)
        outs.append(bnrelu(z, params[f"s_r{i}"], params[f"b_r{i}"]))
    mean = jnp.mean(xb.astype(f32), axis=(1, 2), keepdims=True)
    z = bnrelu(jnp.einsum("nabc,cd->nabd", mean, params["wp"]),
               params["sp"], params["bp"])
    outs.append(jnp.broadcast_to(z, (N, H, W, z.shape[-1])))
    cat = jnp.concatenate(outs, axis=-1)
    wproj_q = params["wproj"].astype(jnp.bfloat16).astype(f32)
    proj = jnp.dot(cat.reshape(N * H * W, -1), wproj_q,
                   preferred_element_type=f32).reshape(N, H, W, -1)
    z = bnrelu(proj, params["sproj"], params["bproj"])
    return jnp.transpose(z, (0, 3, 1, 2))


if __name__ == "__main__":
    key = jax.random.PRNGKey(0)
    kx, kp = jax.random.split(key)

    N, Cin, H, W = 2, 8, 16, 16
    out_ch = 32
    rates = [2, 4, 6]

    x = jax.random.normal(kx, (N, Cin, H, W), jnp.float32)
    params = init_params(kp, Cin, rates, out_ch)

    y = jax.block_until_ready(aspp_forward(x, params, rates))

    y_ref = aspp_reference(x, params, rates)
    assert y.shape == (N, out_ch, H, W), y.shape
    max_err = float(jnp.max(jnp.abs(y - y_ref)))
    assert jnp.allclose(y, y_ref, rtol=2e-3, atol=2e-3), f"max abs err {max_err}"

    print("KERNEL_OK")
</pallas_src>

<mosaic_0001>
module attributes {stable_mosaic.version = 11 : i64} {
  func.func @_pool_kernel(%arg0: i32, %arg1: i32, %arg2: memref<1x256x8xbf16, #tpu.memory_space<vmem>>, %arg3: memref<8x32xf32, #tpu.memory_space<vmem>>, %arg4: memref<1x32xf32, #tpu.memory_space<vmem>>, %arg5: memref<1x32xf32, #tpu.memory_space<vmem>>, %arg6: memref<32x32xbf16, #tpu.memory_space<vmem>>, %arg7: memref<1x1x32xf32, #tpu.memory_space<vmem>>, %arg8: memref<1x8xf32, #tpu.memory_space<vmem>>) attributes {dimension_semantics = [#tpu.dimension_semantics<parallel>, #tpu.dimension_semantics<arbitrary>], iteration_bounds = array<i64: 2, 1>, scalar_prefetch = 0 : i64, scratch_operands = 1 : i64, tpu.core_type = #tpu.core_type<tc>, window_params = [{transform_indices = @transform_0, window_bounds = array<i64: 1, 256, 8>}, {pipeline_mode = #tpu.pipeline_mode<synchronous>, transform_indices = @transform_1, window_bounds = array<i64: 8, 32>}, {pipeline_mode = #tpu.pipeline_mode<synchronous>, transform_indices = @transform_2, window_bounds = array<i64: 1, 32>}, {pipeline_mode = #tpu.pipeline_mode<synchronous>, transform_indices = @transform_3, window_bounds = array<i64: 1, 32>}, {pipeline_mode = #tpu.pipeline_mode<synchronous>, transform_indices = @transform_4, window_bounds = array<i64: 32, 32>}, {transform_indices = @transform_5, window_bounds = array<i64: 1, 1, 32>}]} {
    %c0_i32 = arith.constant 0 : i32
    %0 = arith.cmpi eq, %arg1, %c0_i32 : i32
    %1 = arith.extui %0 : i1 to i32
    %c0_i32_0 = arith.constant 0 : i32
    %2 = arith.cmpi ne, %1, %c0_i32_0 : i32
    scf.if %2 {
      %cst_9 = arith.constant 0.000000e+00 : f32
      %14 = vector.broadcast %cst_9 : f32 to vector<1x8xf32>
      %c0_10 = arith.constant 0 : index
      %c0_11 = arith.constant 0 : index
      %15 = vector.load %arg8[%c0_10, %c0_11] : memref<1x8xf32, #tpu.memory_space<vmem>>, vector<1x8xf32>
      tpu.vector_store %arg8[%c0_10, %c0_11], %14 {strides = array<i32>} : memref<1x8xf32, #tpu.memory_space<vmem>>, vector<1x8xf32>,
    } else {
    }
    %c0 = arith.constant 0 : index
    %c0_1 = arith.constant 0 : index
    %3 = vector.load %arg8[%c0, %c0_1] : memref<1x8xf32, #tpu.memory_space<vmem>>, vector<1x8xf32>
    %c0_2 = arith.constant 0 : index
    %c0_3 = arith.constant 0 : index
    %c0_4 = arith.constant 0 : index
    %4 = vector.load %arg2[%c0_2, %c0_3, %c0_4] : memref<1x256x8xbf16, #tpu.memory_space<vmem>>, vector<1x256x8xbf16>
    %5 = vector.shape_cast %4 : vector<1x256x8xbf16> to vector<256x8xbf16>
    %6 = arith.extf %5 : vector<256x8xbf16> to vector<256x8xf32>
    %cst = arith.constant dense<0.000000e+00> : vector<8xf32>
    %7 = vector.multi_reduction <add>, %6, %cst [0] : vector<256x8xf32> to vector<8xf32>
    %8 = vector.shape_cast %7 : vector<8xf32> to vector<1x8xf32>
    %9 = arith.addf %3, %8 : vector<1x8xf32>
    %c0_5 = arith.constant 0 : index
    %c0_6 = arith.constant 0 : index
    %10 = vector.load %arg8[%c0_5, %c0_6] : memref<1x8xf32, #tpu.memory_space<vmem>>, vector<1x8xf32>
    tpu.vector_store %arg8[%c0_5, %c0_6], %9 {strides = array<i32>} : memref<1x8xf32, #tpu.memory_space<vmem>>, vector<1x8xf32>,
    %c0_i32_7 = arith.constant 0 : i32
    %11 = arith.cmpi eq, %arg1, %c0_i32_7 : i32
    %12 = arith.extui %11 : i1 to i32
    %c0_i32_8 = arith.constant 0 : i32
    %13 = arith.cmpi ne, %12, %c0_i32_8 : i32
    scf.if %13 {
      %c0_9 = arith.constant 0 : index
      %c0_10 = arith.constant 0 : index
      %14 = vector.load %arg8[%c0_9, %c0_10] : memref<1x8xf32, #tpu.memory_space<vmem>>, vector<1x8xf32>
      %cst_11 = arith.constant 3.906250e-03 : f32
      %15 = vector.broadcast %cst_11 : f32 to vector<1x8xf32>
      %16 = arith.mulf %14, %15 : vector<1x8xf32>
      %c0_12 = arith.constant 0 : index
      %c0_13 = arith.constant 0 : index
      %17 = vector.load %arg3[%c0_12, %c0_13] : memref<8x32xf32, #tpu.memory_space<vmem>>, vector<8x32xf32>
      %cst_14 = arith.constant dense<0.000000e+00> : vector<1x32xf32>
      %18 = tpu.matmul %16, %17, %cst_14 {dimension_numbers = #tpu.dot_dimension_numbers<[1], [0], [0], [1], [0, 0, 1, 1], [], []>} : vector<1x8xf32>, vector<8x32xf32>, vector<1x32xf32> -> vector<1x32xf32>
      %c0_15 = arith.constant 0 : index
      %c0_16 = arith.constant 0 : index
      %19 = vector.load %arg4[%c0_15, %c0_16] : memref<1x32xf32, #tpu.memory_space<vmem>>, vector<1x32xf32>
      %20 = arith.mulf %18, %19 : vector<1x32xf32>
      %c0_17 = arith.constant 0 : index
      %c0_18 = arith.constant 0 : index
      %21 = vector.load %arg5[%c0_17, %c0_18] : memref<1x32xf32, #tpu.memory_space<vmem>>, vector<1x32xf32>
      %22 = arith.addf %20, %21 : vector<1x32xf32>
      %cst_19 = arith.constant 0.000000e+00 : f32
      %23 = vector.broadcast %cst_19 : f32 to vector<1x32xf32>
      %24 = arith.maximumf %22, %23 : vector<1x32xf32>
      %c0_20 = arith.constant 0 : index
      %c0_21 = arith.constant 0 : index
      %25 = vector.load %arg6[%c0_20, %c0_21] : memref<32x32xbf16, #tpu.memory_space<vmem>>, vector<32x32xbf16>
      %26 = arith.extf %25 : vector<32x32xbf16> to vector<32x32xf32>
      %cst_22 = arith.constant dense<0.000000e+00> : vector<1x32xf32>
      %27 = tpu.matmul %24, %26, %cst_22 {dimension_numbers = #tpu.dot_dimension_numbers<[1], [0], [0], [1], [0, 0, 1, 1], [], []>} : vector<1x32xf32>, vector<32x32xf32>, vector<1x32xf32> -> vector<1x32xf32>
      %c0_23 = arith.constant 0 : index
      %c0_24 = arith.constant 0 : index
      %c0_25 = arith.constant 0 : index
      %28 = vector.load %arg7[%c0_23, %c0_24, %c0_25] : memref<1x1x32xf32, #tpu.memory_space<vmem>>, vector<1x1x32xf32>
      %29 = vector.shape_cast %28 : vector<1x1x32xf32> to vector<1x32xf32>
      %30 = vector.shape_cast %27 : vector<1x32xf32> to vector<1x1x32xf32>
      tpu.vector_store %arg7[%c0_23, %c0_24, %c0_25], %30 {strides = array<i32>} : memref<1x1x32xf32, #tpu.memory_space<vmem>>, vector<1x1x32xf32>,
    } else {
    }
    return
  }
  func.func @transform_0(%arg0: i32, %arg1: i32) -> (i32, i32, i32) {
    %c0_i32 = arith.constant 0 : i32
    %c0_i32_0 = arith.constant 0 : i32
    return %arg0, %arg1, %c0_i32 : i32, i32, i32
  }
  func.func @transform_1(%arg0: i32, %arg1: i32) -> (i32, i32) {
    %c0_i32 = arith.constant 0 : i32
    %c0_i32_0 = arith.constant 0 : i32
    %c0_i32_1 = arith.constant 0 : i32
    return %c0_i32, %c0_i32_0 : i32, i32
  }
  func.func @transform_2(%arg0: i32, %arg1: i32) -> (i32, i32) {
    %c0_i32 = arith.constant 0 : i32
    %c0_i32_0 = arith.constant 0 : i32
    %c0_i32_1 = arith.constant 0 : i32
    return %c0_i32, %c0_i32_0 : i32, i32
  }
  func.func @transform_3(%arg0: i32, %arg1: i32) -> (i32, i32) {
    %c0_i32 = arith.constant 0 : i32
    %c0_i32_0 = arith.constant 0 : i32
    %c0_i32_1 = arith.constant 0 : i32
    return %c0_i32, %c0_i32_0 : i32, i32
  }
  func.func @transform_4(%arg0: i32, %arg1: i32) -> (i32, i32) {
    %c0_i32 = arith.constant 0 : i32
    %c0_i32_0 = arith.constant 0 : i32
    %c0_i32_1 = arith.constant 0 : i32
    return %c0_i32, %c0_i32_0 : i32, i32
  }
  func.func @transform_5(%arg0: i32, %arg1: i32) -> (i32, i32, i32) {
    %c0_i32 = arith.constant 0 : i32
    %c0_i32_0 = arith.constant 0 : i32
    %c0_i32_1 = arith.constant 0 : i32
    return %arg0, %c0_i32, %c0_i32_0 : i32, i32, i32
  }
}

</mosaic_0001>

<llo_original>
// kernel: tpu_custom_call.1
$region0: #{tpu_custom_call.1}
  #allocation0 [shape = 'u32[]', space=smem, size = 0x4, offset = 0x4, fixed_abs, tag = 'smem constant byte address 0x4 - core index']
  #allocation1 [shape = 'u32[144,128]{1,0:T(1,128)}', space=vmem, size = 0x12000, scoped, tag = 'internal scratch']
  #allocation2 [shape = 'f32[1,8]{1,0:T(1,128)}', space=vmem, size = 0x200, scoped, tag = 'scratch operand']
  %s0 = inlined_call_operand.vmem [shape: bf16[2,256,8], index: 0, kind: input, shape index: {}]
  %s1 = inlined_call_operand.vmem [shape: f32[8,32], index: 1, kind: input, shape index: {}]
  %s2 = inlined_call_operand.vmem [shape: f32[1,32], index: 2, kind: input, shape index: {}]
  %s3 = inlined_call_operand.vmem [shape: f32[1,32], index: 3, kind: input, shape index: {}]
  %s4 = inlined_call_operand.vmem [shape: bf16[32,32], index: 4, kind: input, shape index: {}]
  %s5 = inlined_call_operand.hbm [shape: f32[2,1,32], index: 5, kind: output, shape index: {}]
  %s6 = sld [smem:[#allocation0]]
  $region61: #{tpu_custom_call.1} parent=0
    _
  %s8 = ssub.s32 1, %s6
  %s9 = scalar_select 0, %s8, %s6
  $region1: #{tpu_custom_call.1} parent=0
    #allocation3 [shape = 'u8[1024]{0}', space=vmem, size = 0x400, scoped, tag = 'output window, operand 0']
    #allocation4 [shape = 's32[2]{0}', space=sflag, size = 0x8, scoped, tag = 'scoped memory for tpu_custom_call.1']
    %10 = vsyncpa [#allocation4], 0
    %s11 = scalar_lea.sflag [#allocation4], 1
    %12 = vsyncpa %s11, 0
    loop: start=0, step=1, limit=4
    $region2: #{tpu_custom_call.1} parent=1 // loop_pre_header
      _
    $region3: #{tpu_custom_call.1} parent=1 // loop_header
      %s14 = sphi 0, %s18
      %p15 = scmp.ge.s32.totalorder %s14, 4
      %s21 = sphi 0, %s33
      %s22 = sphi 0, %s29
      %s23 = sphi 0, %s21
      %s24 = sphi 0, %s22
      %s25 = sphi 0, %s23
      %s26 = sphi 0, %s24
      %s38 = sphi 0, %s40
      %s41 = sphi 0, %s38
      %s42 = sphi 0, %s41
      %s58 = sphi 0, %s42
      %s62 = sphi 0, %s62
      %s64 = sphi 0, %s62
      %s65 = sphi 0, %s64
      %s79 = sphi 0, %s65
      %s83 = sphi 0, %s83
      %s85 = sphi 0, %s83
      %s86 = sphi 0, %s85
      %s100 = sphi 0, %s86
      %s104 = sphi 0, %s104
      %s106 = sphi 0, %s104
      %s107 = sphi 0, %s106
      %s121 = sphi 0, %s107
      %s125 = sphi 0, %s125
      %s127 = sphi 0, %s125
      %s128 = sphi 0, %s127
      %s142 = sphi 0, %s128
      %s148 = sphi 0, %s150
      %s151 = sphi 0, %s148
      %s152 = sphi 0, %s151
      %s168 = sphi 0, %s152
    $region4: #{tpu_custom_call.1} parent=1 // loop_header_branch
      %17 = sbr.rel (%p15) target = $region8
    $region5: #{tpu_custom_call.1} parent=1 // loop_body
      %s19 = ssub.s32 %s14, 1
      %s20 = ssub.s32 %s14, 2
      %s27 = sadd.s32 1, %s22
      %p28 = scmp.ge.s32.totalorder %s27, 1
      %s29 = scalar_select %p28, 0, %s27
      %s30 = sadd.s32 1, %s21
      %s31 = scalar_select %p28, %s30, %s21
      %p32 = scmp.ge.s32.totalorder %s31, 2
      %s33 = scalar_select %p32, 0, %s31
      %s34 = ssub.s32 %s21, %s33
      %s35 = ssub.s32 %s22, %s29
      %s36 = sor.u32 %s34, %s35
      %p37 = scmp.eq.s32.totalorder %s36, 0
      %s39 = sadd.s32 %s38, 1
      %s40 = scalar_select %p37, %s38, %s39
      %p43 = pneg %p37
      %p44 = scmp.eq.s32.totalorder %s14, 1
      %p45 = por %p43, %p44
      %p46 = scmp.ne.s32.totalorder %s38, %s41
      %p47 = scmp.eq.s32.totalorder %s14, 0
      %p48 = por %p46, %p47
      %p49 = scmp.ne.s32.totalorder %s38, %s41
      %p50 = scmp.eq.s32.totalorder %s19, 1
      %p51 = por %p49, %p50
      %p52 = scmp.ne.s32.totalorder %s41, %s42
      %p53 = scmp.eq.s32.totalorder %s19, 0
      %p54 = por %p52, %p53
      %p55 = scmp.ne.s32.totalorder %s41, %s42
      %p56 = scmp.eq.s32.totalorder %s20, 1
      %p57 = por %p55, %p56
      %p59 = scmp.ne.s32.totalorder %s42, %s58
      %p60 = scmp.eq.s32.totalorder %s20, 0
      %p61 = por %p59, %p60
      %s63 = sadd.s32 %s62, 1
      %p66 = scmp.eq.s32.totalorder %s14, 1
      %p67 = scmp.ne.s32.totalorder %s62, %s64
      %p68 = scmp.eq.s32.totalorder %s14, 0
      %p69 = por %p67, %p68
      %p70 = scmp.ne.s32.totalorder %s62, %s64
      %p71 = scmp.eq.s32.totalorder %s19, 1
      %p72 = por %p70, %p71
      %p73 = scmp.ne.s32.totalorder %s64, %s65
      %p74 = scmp.eq.s32.totalorder %s19, 0
      %p75 = por %p73, %p74
      %p76 = scmp.ne.s32.totalorder %s64, %s65
      %p77 = scmp.eq.s32.totalorder %s20, 1
      %p78 = por %p76, %p77
      %p80 = scmp.ne.s32.totalorder %s65, %s79
      %p81 = scmp.eq.s32.totalorder %s20, 0
      %p82 = por %p80, %p81
      %s84 = sadd.s32 %s83, 1
      %p87 = scmp.eq.s32.totalorder %s14, 1
      %p88 = scmp.ne.s32.totalorder %s83, %s85
      %p89 = scmp.eq.s32.totalorder %s14, 0
      %p90 = por %p88, %p89
      %p91 = scmp.ne.s32.totalorder %s83, %s85
      %p92 = scmp.eq.s32.totalorder %s19, 1
      %p93 = por %p91, %p92
      %p94 = scmp.ne.s32.totalorder %s85, %s86
      %p95 = scmp.eq.s32.totalorder %s19, 0
      %p96 = por %p94, %p95
      %p97 = scmp.ne.s32.totalorder %s85, %s86
      %p98 = scmp.eq.s32.totalorder %s20, 1
      %p99 = por %p97, %p98
      %p101 = scmp.ne.s32.totalorder %s86, %s100
      %p102 = scmp.eq.s32.totalorder %s20, 0
      %p103 = por %p101, %p102
      %s105 = sadd.s32 %s104, 1
      %p108 = scmp.eq.s32.totalorder %s14, 1
      %p109 = scmp.ne.s32.totalorder %s104, %s106
      %p110 = scmp.eq.s32.totalorder %s14, 0
      %p111 = por %p109, %p110
      %p112 = scmp.ne.s32.totalorder %s104, %s106
      %p113 = scmp.eq.s32.totalorder %s19, 1
      %p114 = por %p112, %p113
      %p115 = scmp.ne.s32.totalorder %s106, %s107
      %p116 = scmp.eq.s32.totalorder %s19, 0
      %p117 = por %p115, %p116
      %p118 = scmp.ne.s32.totalorder %s106, %s107
      %p119 = scmp.eq.s32.totalorder %s20, 1
      %p120 = por %p118, %p119
      %p122 = scmp.ne.s32.totalorder %s107, %s121
      %p123 = scmp.eq.s32.totalorder %s20, 0
      %p124 = por %p122, %p123
      %s126 = sadd.s32 %s125, 1
      %p129 = scmp.eq.s32.totalorder %s14, 1
      %p130 = scmp.ne.s32.totalorder %s125, %s127
      %p131 = scmp.eq.s32.totalorder %s14, 0
      %p132 = por %p130, %p131
      %p133 = scmp.ne.s32.totalorder %s125, %s127
      %p134 = scmp.eq.s32.totalorder %s19, 1
      %p135 = por %p133, %p134
      %p136 = scmp.ne.s32.totalorder %s127, %s128
      %p137 = scmp.eq.s32.totalorder %s19, 0
      %p138 = por %p136, %p137
      %p139 = scmp.ne.s32.totalorder %s127, %s128
      %p140 = scmp.eq.s32.totalorder %s20, 1
      %p141 = por %p139, %p140
      %p143 = scmp.ne.s32.totalorder %s128, %s142
      %p144 = scmp.eq.s32.totalorder %s20, 0
      %p145 = por %p143, %p144
      %s146 = ssub.s32 %s21, %s33
      %p147 = scmp.eq.s32.totalorder %s146, 0
      %s149 = sadd.s32 %s148, 1
      %s150 = scalar_select %p147, %s148, %s149
      %p153 = pneg %p147
      %p154 = scmp.eq.s32.totalorder %s14, 1
      %p155 = por %p153, %p154
      %p156 = scmp.ne.s32.totalorder %s148, %s151
      %p157 = scmp.eq.s32.totalorder %s14, 0
      %p158 = por %p156, %p157
      %p159 = scmp.ne.s32.totalorder %s148, %s151
      %p160 = scmp.eq.s32.totalorder %s19, 1
      %p161 = por %p159, %p160
      %p162 = scmp.ne.s32.totalorder %s151, %s152
      %p163 = scmp.eq.s32.totalorder %s19, 0
      %p164 = por %p162, %p163
      %p165 = scmp.ne.s32.totalorder %s151, %s152
      %p166 = scmp.eq.s32.totalorder %s20, 1
      %p167 = por %p165, %p166
      %p169 = scmp.ne.s32.totalorder %s152, %s168
      %p170 = scmp.eq.s32.totalorder %s20, 0
      %p171 = por %p169, %p170
      %p172 = scmp.le.s32.totalorder 1, %s14
      %p173 = scmp.lt.s32.totalorder %s14, 3
      %p174 = pnand %p172, %p173
      %p175 = pneg %p174
      // Predicated region
      $region9: #{tpu_custom_call.1} parent=5 // pred_check
        _
      $region10: #{tpu_custom_call.1} parent=5 // pred_check_branch
        %177 = sbr.rel (%p174) target = $region12
      $region11: #{tpu_custom_call.1} parent=5 // pred_region
        %s178 = ssub.s32 %s14, 1
        // Predicated region
        $region13: #{tpu_custom_call.1} parent=11 // pred_check
          %p179 = pneg %p75
        $region14: #{tpu_custom_call.1} parent=11 // pred_check_branch
          %181 = sbr.rel (%p179) target = $region16
        $region15: #{tpu_custom_call.1} parent=11 // pred_region
          _
        $region16: #{tpu_custom_call.1} parent=11 // pred_fallthru
          _
        // Predicated region
        $region17: #{tpu_custom_call.1} parent=11 // pred_check
          %p182 = pneg %p96
        $region18: #{tpu_custom_call.1} parent=11 // pred_check_branch
          %184 = sbr.rel (%p182) target = $region20
        $region19: #{tpu_custom_call.1} parent=11 // pred_region
          _
        $region20: #{tpu_custom_call.1} parent=11 // pred_fallthru
          _
        // Predicated region
        $region21: #{tpu_custom_call.1} parent=11 // pred_check
          %p185 = pneg %p117
        $region22: #{tpu_custom_call.1} parent=11 // pred_check_branch
          %187 = sbr.rel (%p185) target = $region24
        $region23: #{tpu_custom_call.1} parent=11 // pred_region
          _
        $region24: #{tpu_custom_call.1} parent=11 // pred_fallthru
          _
        // Predicated region
        $region25: #{tpu_custom_call.1} parent=11 // pred_check
          %p188 = pneg %p138
        $region26: #{tpu_custom_call.1} parent=11 // pred_check_branch
          %190 = sbr.rel (%p188) target = $region28
        $region27: #{tpu_custom_call.1} parent=11 // pred_region
          _
        $region28: #{tpu_custom_call.1} parent=11 // pred_fallthru
          _
      $region12: #{tpu_custom_call.1} parent=5 // pred_fallthru
        _
      %p191 = scmp.lt.s32.totalorder %s14, 2
      // Predicated region
      $region29: #{tpu_custom_call.1} parent=5 // pred_check
        %p192 = pneg %p191
      $region30: #{tpu_custom_call.1} parent=5 // pred_check_branch
        %194 = sbr.rel (%p192) target = $region32
      $region31: #{tpu_custom_call.1} parent=5 // pred_region
        // Predicated region
        $region33: #{tpu_custom_call.1} parent=31 // pred_check
          %p195 = pneg %p48
        $region34: #{tpu_custom_call.1} parent=31 // pred_check_branch
          %197 = sbr.rel (%p195) target = $region36
        $region35: #{tpu_custom_call.1} parent=31 // pred_region
          %s198 = smul.u32 32, %s22
          %p199 = scmp.lt.s32.totalorder %s21, 1
          %s200 = scalar_select %p199, %s21, 1
          %p201 = scmp.lt.s32.totalorder %s198, 31
          %s202 = scalar_select %p201, %s198, 31
          %s203 = smul.addr %s200, 32
          %s204 = sadd.s32 %s202, %s203
          %s205 = smul.addr %s204, 4
          %s206 = scalar_lea.vmem %s0, %s205
          %s207 = smul.u32 32, %s22
        $region36: #{tpu_custom_call.1} parent=31 // pred_fallthru
          _
      $region32: #{tpu_custom_call.1} parent=5 // pred_fallthru
        _
      %p208 = scmp.le.s32.totalorder 1, %s14
      %p209 = scmp.lt.s32.totalorder %s14, 3
      %p210 = pnand %p208, %p209
      %p211 = pneg %p210
      // Predicated region
      $region37: #{tpu_custom_call.1} parent=5 // pred_check
        _
      $region38: #{tpu_custom_call.1} parent=5 // pred_check_branch
        %213 = sbr.rel (%p210) target = $region40
      $region39: #{tpu_custom_call.1} parent=5 // pred_region
        %s214 = ssub.s32 %s14, 1
        %s215 = smul.u32 32, %s24
        %p216 = scmp.lt.s32.totalorder %s23, 1
        %s217 = scalar_select %p216, %s23, 1
        %p218 = scmp.lt.s32.totalorder %s215, 31
        %s219 = scalar_select %p218, %s215, 31
        %s220 = smul.addr %s217, 32
        %s221 = sadd.s32 %s219, %s220
        %s222 = smul.addr %s221, 4
        %s223 = scalar_lea.vmem %s0, %s222
        %p224 = pneg %p54
        %p225 = pneg %p51
        %p226 = pneg %p75
        %p227 = pneg %p72
        %p228 = pneg %p96
        %p229 = pneg %p93
        %p230 = pneg %p117
        %p231 = pneg %p114
        %p232 = pneg %p138
        %p233 = pneg %p135
        %p234 = pneg %p164
        %p235 = pneg %p161
        %s236 = sand.u32 %s151, 1
        %s237 = scalar_lea.sflag [#allocation4], %s236
        %s238 = sand.u32 %s151, 1
        %s239 = scalar_lea.vmem [#allocation3], %s238
        %s240 = smul.u32 32, %s24
        %p241 = scmp.lt.s32.totalorder %s23, 1
        %s242 = scalar_select %p241, %s23, 1
        %p243 = scmp.lt.s32.totalorder %s240, 31
        %s244 = scalar_select %p243, %s240, 31
        %s245 = smul.addr %s242, 32
        %s246 = sadd.s32 %s244, %s245
        %s247 = smul.addr %s246, 4
        %s248 = scalar_lea.vmem %s0, %s247
        %s249 = smul.u32 32, %s24
        %p250 = scmp.eq.s32.totalorder %s24, 0
        // Predicated region
        $region41: #{tpu_custom_call.1} parent=39 // pred_check
          %p251 = pneg %p250
        $region42: #{tpu_custom_call.1} parent=39 // pred_check_branch
          %253 = sbr.rel (%p251) target = $region44
        $region43: #{tpu_custom_call.1} parent=39 // pred_region
          %vm254 = vcmask 57344
          %255 = vst.msk [vmem:[#allocation2] sm:$0x1] %vm254, 0.0
        $region44: #{tpu_custom_call.1} parent=39 // pred_fallthru
          _
        %v256 = vld [vmem:[#allocation2] sm:$0x1]
        %v257 = vld [vmem:[%s248] sm:$0xf]
        %v258 = vld [vmem:[%s248 + $0x4] sm:$0xf]
        %v259 = vld [vmem:[%s248 + $0x8] sm:$0xf]
        %v260 = vld [vmem:[%s248 + $0xc] sm:$0xf]
        %v261 = vld [vmem:[%s248 + $0x10] sm:$0xf]
        %v262 = vld [vmem:[%s248 + $0x14] sm:$0xf]
        %v263 = vld [vmem:[%s248 + $0x18] sm:$0xf]
        %v264 = vld [vmem:[%s248 + $0x1c] sm:$0xf]
        %v265 = vld [vmem:[%s248 + $0x20] sm:$0xf]
        %v266 = vld [vmem:[%s248 + $0x24] sm:$0xf]
        %v267 = vld [vmem:[%s248 + $0x28] sm:$0xf]
        %v268 = vld [vmem:[%s248 + $0x2c] sm:$0xf]
        %v269 = vld [vmem:[%s248 + $0x30] sm:$0xf]
        %v270 = vld [vmem:[%s248 + $0x34] sm:$0xf]
        %v271 = vld [vmem:[%s248 + $0x38] sm:$0xf]
        %v272 = vld [vmem:[%s248 + $0x3c] sm:$0xf]
        %v273 = vld [vmem:[%s248 + $0x40] sm:$0xf]
        %v274 = vld [vmem:[%s248 + $0x44] sm:$0xf]
        %v275 = vld [vmem:[%s248 + $0x48] sm:$0xf]
        %v276 = vld [vmem:[%s248 + $0x4c] sm:$0xf]
        %v277 = vld [vmem:[%s248 + $0x50] sm:$0xf]
        %v278 = vld [vmem:[%s248 + $0x54] sm:$0xf]
        %v279 = vld [vmem:[%s248 + $0x58] sm:$0xf]
        %v280 = vld [vmem:[%s248 + $0x5c] sm:$0xf]
        %v281 = vld [vmem:[%s248 + $0x60] sm:$0xf]
        %v282 = vld [vmem:[%s248 + $0x64] sm:$0xf]
        %v283 = vld [vmem:[%s248 + $0x68] sm:$0xf]
        %v284 = vld [vmem:[%s248 + $0x6c] sm:$0xf]
        %v285 = vld [vmem:[%s248 + $0x70] sm:$0xf]
        %v286 = vld [vmem:[%s248 + $0x74] sm:$0xf]
        %v287 = vld [vmem:[%s248 + $0x78] sm:$0xf]
        %v288 = vld [vmem:[%s248 + $0x7c] sm:$0xf]
        %v289 = vunpack.c.l.bf16 %v257
        %v290 = vunpack.c.l.bf16 %v258
        %v291 = vunpack.c.l.bf16 %v259
        %v292 = vunpack.c.l.bf16 %v260
        %v293 = vunpack.c.l.bf16 %v261
        %v294 = vunpack.c.l.bf16 %v262
        %v295 = vunpack.c.l.bf16 %v263
        %v296 = vunpack.c.l.bf16 %v264
        %v297 = vunpack.c.l.bf16 %v265
        %v298 = vunpack.c.l.bf16 %v266
        %v299 = vunpack.c.l.bf16 %v267
        %v300 = vunpack.c.l.bf16 %v268
        %v301 = vunpack.c.l.bf16 %v269
        %v302 = vunpack.c.l.bf16 %v270
        %v303 = vunpack.c.l.bf16 %v271
        %v304 = vunpack.c.l.bf16 %v272
        %v305 = vunpack.c.l.bf16 %v273
        %v306 = vunpack.c.l.bf16 %v274
        %v307 = vunpack.c.l.bf16 %v275
        %v308 = vunpack.c.l.bf16 %v276
        %v309 = vunpack.c.l.bf16 %v277
        %v310 = vunpack.c.l.bf16 %v278
        %v311 = vunpack.c.l.bf16 %v279
        %v312 = vunpack.c.l.bf16 %v280
        %v313 = vunpack.c.l.bf16 %v281
        %v314 = vunpack.c.l.bf16 %v282
        %v315 = vunpack.c.l.bf16 %v283
        %v316 = vunpack.c.l.bf16 %v284
        %v317 = vunpack.c.l.bf16 %v285
        %v318 = vunpack.c.l.bf16 %v286
        %v319 = vunpack.c.l.bf16 %v287
        %v320 = vunpack.c.l.bf16 %v288
        %vm321 = vcmask 64512
        %v322 = vsel %vm321, %v289, 0.0
        %v323 = vsel %vm321, %v290, 0.0
        %v324 = vadd.f32 %v322, %v323
        %v325 = vsel %vm321, %v291, 0.0
        %v326 = vadd.f32 %v324, %v325
        %v327 = vsel %vm321, %v292, 0.0
        %v328 = vadd.f32 %v326, %v327
        %v329 = vsel %vm321, %v293, 0.0
        %v330 = vadd.f32 %v328, %v329
        %v331 = vsel %vm321, %v294, 0.0
        %v332 = vadd.f32 %v330, %v331
        %v333 = vsel %vm321, %v295, 0.0
        %v334 = vadd.f32 %v332, %v333
        %v335 = vsel %vm321, %v296, 0.0
        %v336 = vadd.f32 %v334, %v335
        %v337 = vsel %vm321, %v297, 0.0
        %v338 = vadd.f32 %v336, %v337
        %v339 = vsel %vm321, %v298, 0.0
        %v340 = vadd.f32 %v338, %v339
        %v341 = vsel %vm321, %v299, 0.0
        %v342 = vadd.f32 %v340, %v341
        %v343 = vsel %vm321, %v300, 0.0
        %v344 = vadd.f32 %v342, %v343
        %v345 = vsel %vm321, %v301, 0.0
        %v346 = vadd.f32 %v344, %v345
        %v347 = vsel %vm321, %v302, 0.0
        %v348 = vadd.f32 %v346, %v347
        %v349 = vsel %vm321, %v303, 0.0
        %v350 = vadd.f32 %v348, %v349
        %v351 = vsel %vm321, %v304, 0.0
        %v352 = vadd.f32 %v350, %v351
        %v353 = vsel %vm321, %v305, 0.0
        %v354 = vadd.f32 %v352, %v353
        %v355 = vsel %vm321, %v306, 0.0
        %v356 = vadd.f32 %v354, %v355
        %v357 = vsel %vm321, %v307, 0.0
        %v358 = vadd.f32 %v356, %v357
        %v359 = vsel %vm321, %v308, 0.0
        %v360 = vadd.f32 %v358, %v359
        %v361 = vsel %vm321, %v309, 0.0
        %v362 = vadd.f32 %v360, %v361
        %v363 = vsel %vm321, %v310, 0.0
        %v364 = vadd.f32 %v362, %v363
        %v365 = vsel %vm321, %v311, 0.0
        %v366 = vadd.f32 %v364, %v365
        %v367 = vsel %vm321, %v312, 0.0
        %v368 = vadd.f32 %v366, %v367
        %v369 = vsel %vm321, %v313, 0.0
        %v370 = vadd.f32 %v368, %v369
        %v371 = vsel %vm321, %v314, 0.0
        %v372 = vadd.f32 %v370, %v371
        %v373 = vsel %vm321, %v315, 0.0
        %v374 = vadd.f32 %v372, %v373
        %v375 = vsel %vm321, %v316, 0.0
        %v376 = vadd.f32 %v374, %v375
        %v377 = vsel %vm321, %v317, 0.0
        %v378 = vadd.f32 %v376, %v377
        %v379 = vsel %vm321, %v318, 0.0
        %v380 = vadd.f32 %v378, %v379
        %v381 = vsel %vm321, %v319, 0.0
        %v382 = vadd.f32 %v380, %v381
        %v383 = vsel %vm321, %v320, 0.0
        %v384 = vadd.f32 %v382, %v383
        %v385 = vrot.slane %v384, 4
        %v386 = vadd.f32 %v384, %v385
        %v387 = vrot.slane %v386, 2
        %v388 = vadd.f32 %v386, %v387
        %v389 = vrot.slane %v388, 1
        %v390 = vadd.f32 %v388, %v389
        %v391 = vadd.f32 %v256, %v390
        %vm392 = vcmask 57344
        %393 = vst.msk [vmem:[#allocation2] sm:$0x1] %vm392, %v391
        // Predicated region
        $region45: #{tpu_custom_call.1} parent=39 // pred_check
          %p394 = pneg %p250
        $region46: #{tpu_custom_call.1} parent=39 // pred_check_branch
          %396 = sbr.rel (%p394) target = $region48
        $region47: #{tpu_custom_call.1} parent=39 // pred_region
          %v397 = vld [vmem:[#allocation2] sm:$0x1]
          %v398 = vmul.f32 %v397, 0.00390625
          %v399 = vld [vmem:[%s1] sm:$0xff]
          %v401 = vsel %vm321, %v398, 0
          %403 = vmatprep.subr.mxu0 0.0
          %404 = vmatpush1.msra.mxu0 0.0
          %405 = vmatprep.subr.mxu0 0.0
          %406 = vmatpush1.msra.mxu0 0.0
          %407 = vmatprep.subr.mxu0 0.0
          %408 = vmatpush1.msra.mxu0 0.0
          %409 = vmatprep.subr.mxu0 0.0
          %410 = vmatpush1.msra.mxu0 0.0
          %411 = vmatprep.subr.mxu0 0.0
          %412 = vmatpush1.msra.mxu0 0.0
          %413 = vmatprep.subr.mxu0 0.0
          %414 = vmatpush1.msra.mxu0 0.0
          %415 = vmatprep.subr.mxu0 0.0
          %416 = vmatpush1.msra.mxu0 0.0
          %417 = vmatprep.subr.mxu0 0.0
          %418 = vmatpush1.msra.mxu0 0.0
          %419 = vmatprep.subr.mxu0 0.0
          %420 = vmatpush1.msra.mxu0 0.0
          %421 = vmatprep.subr.mxu0 0.0
          %422 = vmatpush1.msra.mxu0 0.0
          %423 = vmatprep.subr.mxu0 0.0
          %424 = vmatpush1.msra.mxu0 0.0
          %425 = vmatprep.subr.mxu0 0.0
          %426 = vmatpush1.msra.mxu0 0.0
          %427 = vmatprep.subr.mxu0 0.0
          %428 = vmatpush1.msra.mxu0 0.0
          %429 = vmatprep.subr.mxu0 0.0
          %430 = vmatpush1.msra.mxu0 0.0
          %431 = vmatprep.subr.mxu0 0.0
          %432 = vmatpush1.msra.mxu0 0.0
          %433 = vmatprep.subr.mxu0 0.0
          %434 = vmatpush1.msra.mxu0 %v399
          %435 = vmatprep.subr.mxu0 0.0
          %436 = vmatpush2.msra.mxu0 0.0
          %437 = vmatprep.subr.mxu0 0.0
          %438 = vmatpush2.msra.mxu0 0.0
          %439 = vmatprep.subr.mxu0 0.0
          %440 = vmatpush2.msra.mxu0 0.0
          %441 = vmatprep.subr.mxu0 0.0
          %442 = vmatpush2.msra.mxu0 0.0
          %443 = vmatprep.subr.mxu0 0.0
          %444 = vmatpush2.msra.mxu0 0.0
          %445 = vmatprep.subr.mxu0 0.0
          %446 = vmatpush2.msra.mxu0 0.0
          %447 = vmatprep.subr.mxu0 0.0
          %448 = vmatpush2.msra.mxu0 0.0
          %449 = vmatprep.subr.mxu0 0.0
          %450 = vmatpush2.msra.mxu0 0.0
          %451 = vmatprep.subr.mxu0 0.0
          %452 = vmatpush2.msra.mxu0 0.0
          %453 = vmatprep.subr.mxu0 0.0
          %454 = vmatpush2.msra.mxu0 0.0
          %455 = vmatprep.subr.mxu0 0.0
          %456 = vmatpush2.msra.mxu0 0.0
          %457 = vmatprep.subr.mxu0 0.0
          %458 = vmatpush2.msra.mxu0 0.0
          %459 = vmatprep.subr.mxu0 0.0
          %460 = vmatpush2.msra.mxu0 0.0
          %461 = vmatprep.subr.mxu0 0.0
          %462 = vmatpush2.msra.mxu0 0.0
          %463 = vmatprep.subr.mxu0 0.0
          %464 = vmatpush2.msra.mxu0 0.0
          %465 = vmatprep.subr.mxu0 0.0
          %466 = vmatpush2.msra.mxu0 0.0
          %467 = vmatprep.mubr.f32.mxu0 0.0
          %468 = vmatmul.mubr.f32.gmra.mxu0 %v401
          %v469 = vpop.f32.mrf.mxu0
          %v470 = vadd.f32 0.0, %v469
          %v471 = vpop.f32.mrf.mxu0
          %472 = vdwg.mxu0
          %v473 = vld [vmem:[%s2] sm:$0x1]
          %v474 = vmul.f32 %v470, %v473
          %v475 = vld [vmem:[%s3] sm:$0x1]
          %v476 = vadd.f32 %v474, %v475
          %v477 = vmax.f32 %v476, 0.0
          %v478 = vld [vmem:[%s4] sm:$0xf]
          %v479 = vld [vmem:[%s4 + $0x4] sm:$0xf]
          %v480 = vld [vmem:[%s4 + $0x8] sm:$0xf]
          %v481 = vld [vmem:[%s4 + $0xc] sm:$0xf]
          %v482 = vunpack.c.l.bf16 %v478
          %v483 = vunpack.c.l.bf16 %v479
          %v484 = vunpack.c.l.bf16 %v480
          %v485 = vunpack.c.l.bf16 %v481
          %vm486 = vcmask 261120
          %v488 = vsel %vm486, %v477, 0
          %490 = vmatprep.subr.mxu0 0.0
          %491 = vmatpush1.msra.mxu0 0.0
          %492 = vmatprep.subr.mxu0 0.0
          %493 = vmatpush1.msra.mxu0 0.0
          %494 = vmatprep.subr.mxu0 0.0
          %495 = vmatpush1.msra.mxu0 0.0
          %496 = vmatprep.subr.mxu0 0.0
          %497 = vmatpush1.msra.mxu0 0.0
          %498 = vmatprep.subr.mxu0 0.0
          %499 = vmatpush1.msra.mxu0 0.0
          %500 = vmatprep.subr.mxu0 0.0
          %501 = vmatpush1.msra.mxu0 0.0
          %502 = vmatprep.subr.mxu0 0.0
          %503 = vmatpush1.msra.mxu0 0.0
          %504 = vmatprep.subr.mxu0 0.0
          %505 = vmatpush1.msra.mxu0 0.0
          %506 = vmatprep.subr.mxu0 0.0
          %507 = vmatpush1.msra.mxu0 0.0
          %508 = vmatprep.subr.mxu0 0.0
          %509 = vmatpush1.msra.mxu0 0.0
          %510 = vmatprep.subr.mxu0 0.0
          %511 = vmatpush1.msra.mxu0 0.0
          %512 = vmatprep.subr.mxu0 0.0
          %513 = vmatpush1.msra.mxu0 0.0
          %514 = vmatprep.subr.mxu0 0.0
          %515 = vmatpush1.msra.mxu0 %v485
          %516 = vmatprep.subr.mxu0 0.0
          %517 = vmatpush1.msra.mxu0 %v484
          %518 = vmatprep.subr.mxu0 0.0
          %519 = vmatpush1.msra.mxu0 %v483
          %520 = vmatprep.subr.mxu0 0.0
          %521 = vmatpush1.msra.mxu0 %v482
          %522 = vmatprep.subr.mxu0 0.0
          %523 = vmatpush2.msra.mxu0 0.0
          %524 = vmatprep.subr.mxu0 0.0
          %525 = vmatpush2.msra.mxu0 0.0
          %526 = vmatprep.subr.mxu0 0.0
          %527 = vmatpush2.msra.mxu0 0.0
          %528 = vmatprep.subr.mxu0 0.0
          %529 = vmatpush2.msra.mxu0 0.0
          %530 = vmatprep.subr.mxu0 0.0
          %531 = vmatpush2.msra.mxu0 0.0
          %532 = vmatprep.subr.mxu0 0.0
          %533 = vmatpush2.msra.mxu0 0.0
          %534 = vmatprep.subr.mxu0 0.0
          %535 = vmatpush2.msra.mxu0 0.0
          %536 = vmatprep.subr.mxu0 0.0
          %537 = vmatpush2.msra.mxu0 0.0
          %538 = vmatprep.subr.mxu0 0.0
          %539 = vmatpush2.msra.mxu0 0.0
          %540 = vmatprep.subr.mxu0 0.0
          %541 = vmatpush2.msra.mxu0 0.0
          %542 = vmatprep.subr.mxu0 0.0
          %543 = vmatpush2.msra.mxu0 0.0
          %544 = vmatprep.subr.mxu0 0.0
          %545 = vmatpush2.msra.mxu0 0.0
          %546 = vmatprep.subr.mxu0 0.0
          %547 = vmatpush2.msra.mxu0 0.0
          %548 = vmatprep.subr.mxu0 0.0
          %549 = vmatpush2.msra.mxu0 0.0
          %550 = vmatprep.subr.mxu0 0.0
          %551 = vmatpush2.msra.mxu0 0.0
          %552 = vmatprep.subr.mxu0 0.0
          %553 = vmatpush2.msra.mxu0 0.0
          %554 = vmatprep.mubr.f32.mxu0 0.0
          %555 = vmatmul.mubr.f32.gmra.mxu0 %v488
          %v556 = vpop.f32.mrf.mxu0
          %v557 = vadd.f32 0.0, %v556
          %v558 = vpop.f32.mrf.mxu0
          %559 = vdwg.mxu0
          %vm560 = vcmask 253952
          %561 = vst.msk [vmem:[%s239] sm:$0x1] %vm560, %v557
        $region48: #{tpu_custom_call.1} parent=39 // pred_fallthru
          _
        %s562 = sand.u32 %s151, 1
        %s563 = scalar_lea.sflag [#allocation4], %s562
        %s564 = sand.u32 %s151, 1
        %s565 = scalar_lea.vmem [#allocation3], %s564
        // Predicated region
        $region49: #{tpu_custom_call.1} parent=39 // pred_check
          %p566 = pneg %p161
        $region50: #{tpu_custom_call.1} parent=39 // pred_check_branch
          %568 = sbr.rel (%p566) target = $region52
        $region51: #{tpu_custom_call.1} parent=39 // pred_region
          %s570 = ssub.s32 16, 16
          %571 = vsyncadd %s563, %s570
          %s572 = smul.addr %s23, 16
          %s573 = scalar_lea.hbm %s5, %s572
          %s575 = sshll.u32 %s565, 4
          %s576 = int_to_ptr.vmem [resolvable:$true] %s575
          %578 = dma.vmem_to_hbm [thread:$0]  %s576, 16, %s573, %s563
        $region52: #{tpu_custom_call.1} parent=39 // pred_fallthru
          _
      $region40: #{tpu_custom_call.1} parent=5 // pred_fallthru
        _
      %p579 = scmp.le.s32.totalorder 2, %s14
      // Predicated region
      $region53: #{tpu_custom_call.1} parent=5 // pred_check
        %p580 = pneg %p579
      $region54: #{tpu_custom_call.1} parent=5 // pred_check_branch
        %582 = sbr.rel (%p580) target = $region56
      $region55: #{tpu_custom_call.1} parent=5 // pred_region
        %s583 = ssub.s32 %s14, 2
        // Predicated region
        $region57: #{tpu_custom_call.1} parent=55 // pred_check
          %p584 = pneg %p167
        $region58: #{tpu_custom_call.1} parent=55 // pred_check_branch
          %586 = sbr.rel (%p584) target = $region60
        $region59: #{tpu_custom_call.1} parent=55 // pred_region
          %s587 = sand.u32 %s152, 1
          %s588 = scalar_lea.sflag [#allocation4], %s587
          %s589 = sand.u32 %s152, 1
          %s590 = scalar_lea.vmem [#allocation3], %s589
          %591 = dma.done %s588, 16
        $region60: #{tpu_custom_call.1} parent=55 // pred_fallthru
          _
      $region56: #{tpu_custom_call.1} parent=5 // pred_fallthru
        _
    $region6: #{tpu_custom_call.1} parent=1 // loop_footer
      %s18 = sadd.s32 1, %s14
    $region7: #{tpu_custom_call.1} parent=1 // loop_footer_branch
      %13 = sbr.rel target = $region3
    $region8: #{tpu_custom_call.1} parent=1 // loop_exit
      _
    %592 = vsyncpa [#allocation4], 1
    %s593 = scalar_lea.sflag [#allocation4], 1
    %594 = vsyncpa %s593, 1

</llo_original>
